<compile_context>
chip_gen: v7x
topology: tpu7x:2x2x1
jax: 0.10.0
libtpu: 0.0.40
codegen_flags: <defaults>
</compile_context>

<pallas_src>
import functools

import jax
import jax.numpy as jnp
from jax.experimental import pallas as pl
from jax.experimental.pallas import tpu as pltpu

# Keep 2 inputs x 2 pipeline buffers under the smallest default scoped-VMEM
# limit (16 MiB on v5e) with headroom.
_VMEM_TILE_BUDGET_BYTES = 12 * 1024 * 1024


def _pg_loss_kernel(lp_ref, rw_ref, out_ref, acc_ref, *,
                    inv_batch, true_batch, tile_rows, needs_mask):
    i = pl.program_id(0)

    @pl.when(i == 0)
    def _init():
        acc_ref[...] = jnp.zeros_like(acc_ref)

    # Upcast in-vreg (free relative to the DMA) and multiply on the VPU.
    prod = lp_ref[...].astype(jnp.float32) * rw_ref[...].astype(jnp.float32)  # (TB, L)

    if needs_mask:
        # Boundary tile may have read past the true batch; zero those rows.
        # (Out-of-bounds garbage -> 0 via the select, so NaN/Inf cannot leak.)
        row = (jax.lax.broadcasted_iota(jnp.int32, (prod.shape[0], 1), 0)
               + i * tile_rows)                                               # (TB, 1)
        prod = jnp.where(row < true_batch, prod, 0.0)

    # Per-row nonzero count (lane reduction on the XLU), + eps.
    lengths = jnp.sum((prod != 0.0).astype(jnp.float32),
                      axis=1, keepdims=True) + 1e-9                           # (TB, 1)

    # Row sum first, then a single divide per row (algebraically identical to
    # dividing the whole tile, since `lengths` is constant per row).
    row_sum = jnp.sum(prod, axis=1, keepdims=True)                            # (TB, 1)
    acc_ref[...] += jnp.sum(row_sum / lengths, axis=0, keepdims=True)         # (1, 1)

    @pl.when(i == pl.num_programs(0) - 1)
    def _finalize():
        out_ref[...] = -acc_ref[...] * jnp.float32(inv_batch)


def _choose_tile_rows(B, L, itemsize, block_rows):
    """Pick the batch-tile height: multiple of 8 (or the full batch)."""
    # Whole array as a single block when it fits the VMEM budget.
    if B <= block_rows and 2 * 2 * B * L * itemsize <= _VMEM_TILE_BUDGET_BYTES:
        return B
    if B < 8:
        return B  # full-dim block; tiny batch always fits well enough.
    tb = max(8, min(block_rows, (B // 8) * 8) // 8 * 8)
    while tb > 8 and 2 * 2 * tb * L * itemsize > _VMEM_TILE_BUDGET_BYTES:
        tb = max(8, (tb // 2) // 8 * 8)
    return tb


def pg_loss(log_probs: jax.Array, rewards: jax.Array, *,
            block_rows: int = 1024) -> jax.Array:
    """Policy-gradient loss. log_probs, rewards: (batch, max_len), any float dtype."""
    assert log_probs.shape == rewards.shape
    B, L = log_probs.shape

    itemsize = max(jnp.dtype(log_probs.dtype).itemsize,
                   jnp.dtype(rewards.dtype).itemsize)
    tb = _choose_tile_rows(B, L, itemsize, block_rows)
    grid_n = pl.cdiv(B, tb)
    needs_mask = (grid_n * tb != B)

    kernel = functools.partial(
        _pg_loss_kernel,
        inv_batch=1.0 / float(B),
        true_batch=B,
        tile_rows=tb,
        needs_mask=needs_mask,
    )

    out = pl.pallas_call(
        kernel,
        out_shape=jax.ShapeDtypeStruct((1, 1), jnp.float32),
        grid_spec=pltpu.PrefetchScalarGridSpec(
            num_scalar_prefetch=0,
            grid=(grid_n,),
            in_specs=[
                pl.BlockSpec((tb, L), lambda i: (i, 0)),
                pl.BlockSpec((tb, L), lambda i: (i, 0)),
            ],
            out_specs=pl.BlockSpec((1, 1), lambda i: (0, 0)),
            scratch_shapes=[pltpu.VMEM((1, 1), jnp.float32)],
        ),
        compiler_params=pltpu.CompilerParams(
            # The single grid axis carries the scalar accumulator -> reduction.
            dimension_semantics=("arbitrary",),
        ),
    )(log_probs, rewards)
    return out[0, 0]


def _pg_loss_ref(log_probs, rewards):
    log_probs = log_probs.astype(jnp.float32)
    rewards = rewards.astype(jnp.float32)
    loss = log_probs * rewards
    lengths = jnp.sum((loss != 0.0).astype(jnp.float32), axis=1, keepdims=True) + 1e-9
    loss = loss / lengths
    return -jnp.mean(jnp.sum(loss, axis=1))


def _make_inputs(key, B, L):
    k1, k2, k3 = jax.random.split(key, 3)
    # log-probs are negative (log of probabilities)
    log_probs = -jax.random.uniform(k1, (B, L), dtype=jnp.float32, minval=0.1, maxval=5.0)
    rewards = jax.random.uniform(k2, (B, L), dtype=jnp.float32, minval=0.0, maxval=1.0)
    # Simulate padding: zero out rewards past a per-row "valid length".
    valid_lens = jax.random.randint(k3, (B, 1), minval=4, maxval=L + 1)
    positions = jnp.arange(L)[None, :]
    rewards = jnp.where(positions < valid_lens, rewards, 0.0)
    return log_probs, rewards


if __name__ == "__main__":
    key = jax.random.PRNGKey(0)
    key_a, key_b, key_c = jax.random.split(key, 3)

    # Small shape matching the module's (batch_size, max_len) layout.
    # Whole-array single-block path (grid of 1).
    log_probs, rewards = _make_inputs(key_a, 8, 128)
    result = pg_loss(log_probs, rewards)
    jax.block_until_ready(result)
    ref = _pg_loss_ref(log_probs, rewards)
    assert jnp.allclose(result, ref, rtol=1e-4, atol=1e-6), (result, ref)

    # Non-multiple-of-tile batch exercises the boundary-masking path (no more
    # wrapper-side padding); bf16 inputs exercise the in-kernel upcast.
    lp2, rw2 = _make_inputs(key_b, 20, 256)
    result2 = pg_loss(lp2.astype(jnp.bfloat16), rw2.astype(jnp.bfloat16), block_rows=8)
    jax.block_until_ready(result2)
    ref2 = _pg_loss_ref(lp2.astype(jnp.bfloat16), rw2.astype(jnp.bfloat16))
    assert jnp.allclose(result2, ref2, rtol=1e-3, atol=1e-5), (result2, ref2)

    # Batch smaller than 8 rows -> full-dim block (allowed by the (8,128) rule).
    lp3, rw3 = _make_inputs(key_c, 5, 256)
    result3 = pg_loss(lp3, rw3)
    jax.block_until_ready(result3)
    ref3 = _pg_loss_ref(lp3, rw3)
    assert jnp.allclose(result3, ref3, rtol=1e-4, atol=1e-6), (result3, ref3)

    print("KERNEL_OK")
</pallas_src>

<mosaic_0001>
module attributes {stable_mosaic.version = 11 : i64} {
  func.func @_pg_loss_kernel(%arg0: i32, %arg1: memref<8x128xf32, #tpu.memory_space<vmem>>, %arg2: memref<8x128xf32, #tpu.memory_space<vmem>>, %arg3: memref<1x1xf32, #tpu.memory_space<vmem>>, %arg4: memref<1x1xf32, #tpu.memory_space<vmem>>) attributes {dimension_semantics = [#tpu.dimension_semantics<arbitrary>], iteration_bounds = array<i64: 1>, scalar_prefetch = 0 : i64, scratch_operands = 1 : i64, tpu.core_type = #tpu.core_type<tc>, window_params = [{transform_indices = @transform_0, window_bounds = array<i64: 8, 128>}, {transform_indices = @transform_1, window_bounds = array<i64: 8, 128>}, {pipeline_mode = #tpu.pipeline_mode<synchronous>, transform_indices = @transform_2, window_bounds = array<i64: 1, 1>}]} {
    %c0_i32 = arith.constant 0 : i32
    %0 = arith.cmpi eq, %arg0, %c0_i32 : i32
    %1 = arith.extui %0 : i1 to i32
    %c0_i32_0 = arith.constant 0 : i32
    %2 = arith.cmpi ne, %1, %c0_i32_0 : i32
    scf.if %2 {
      %cst_14 = arith.constant 0.000000e+00 : f32
      %25 = vector.broadcast %cst_14 : f32 to vector<1x1xf32>
      %c0_15 = arith.constant 0 : index
      %c0_16 = arith.constant 0 : index
      %26 = vector.load %arg4[%c0_15, %c0_16] : memref<1x1xf32, #tpu.memory_space<vmem>>, vector<1x1xf32>
      tpu.vector_store %arg4[%c0_15, %c0_16], %25 {strides = array<i32>} : memref<1x1xf32, #tpu.memory_space<vmem>>, vector<1x1xf32>,
    } else {
    }
    %c0 = arith.constant 0 : index
    %c0_1 = arith.constant 0 : index
    %3 = vector.load %arg1[%c0, %c0_1] : memref<8x128xf32, #tpu.memory_space<vmem>>, vector<8x128xf32>
    %c0_2 = arith.constant 0 : index
    %c0_3 = arith.constant 0 : index
    %4 = vector.load %arg2[%c0_2, %c0_3] : memref<8x128xf32, #tpu.memory_space<vmem>>, vector<8x128xf32>
    %5 = arith.mulf %3, %4 : vector<8x128xf32>
    %cst = arith.constant 0.000000e+00 : f32
    %6 = vector.broadcast %cst : f32 to vector<8x128xf32>
    %7 = arith.cmpf one, %5, %6 : vector<8x128xf32>
    %8 = arith.extui %7 : vector<8x128xi1> to vector<8x128xi32>
    %9 = arith.sitofp %8 : vector<8x128xi32> to vector<8x128xf32>
    %cst_4 = arith.constant dense<0.000000e+00> : vector<8xf32>
    %10 = vector.multi_reduction <add>, %9, %cst_4 [1] : vector<8x128xf32> to vector<8xf32>
    %11 = vector.shape_cast %10 : vector<8xf32> to vector<8x1xf32>
    %cst_5 = arith.constant 9.99999971E-10 : f32
    %12 = vector.broadcast %cst_5 : f32 to vector<8x1xf32>
    %13 = arith.addf %11, %12 : vector<8x1xf32>
    %cst_6 = arith.constant dense<0.000000e+00> : vector<8xf32>
    %14 = vector.multi_reduction <add>, %5, %cst_6 [1] : vector<8x128xf32> to vector<8xf32>
    %15 = vector.shape_cast %14 : vector<8xf32> to vector<8x1xf32>
    %c0_7 = arith.constant 0 : index
    %c0_8 = arith.constant 0 : index
    %16 = vector.load %arg4[%c0_7, %c0_8] : memref<1x1xf32, #tpu.memory_space<vmem>>, vector<1x1xf32>
    %17 = arith.divf %15, %13 : vector<8x1xf32>
    %cst_9 = arith.constant dense<0.000000e+00> : vector<1xf32>
    %18 = vector.multi_reduction <add>, %17, %cst_9 [0] : vector<8x1xf32> to vector<1xf32>
    %19 = vector.shape_cast %18 : vector<1xf32> to vector<1x1xf32>
    %20 = arith.addf %16, %19 : vector<1x1xf32>
    %c0_10 = arith.constant 0 : index
    %c0_11 = arith.constant 0 : index
    %21 = vector.load %arg4[%c0_10, %c0_11] : memref<1x1xf32, #tpu.memory_space<vmem>>, vector<1x1xf32>
    tpu.vector_store %arg4[%c0_10, %c0_11], %20 {strides = array<i32>} : memref<1x1xf32, #tpu.memory_space<vmem>>, vector<1x1xf32>,
    %c0_i32_12 = arith.constant 0 : i32
    %22 = arith.cmpi eq, %arg0, %c0_i32_12 : i32
    %23 = arith.extui %22 : i1 to i32
    %c0_i32_13 = arith.constant 0 : i32
    %24 = arith.cmpi ne, %23, %c0_i32_13 : i32
    scf.if %24 {
      %c0_14 = arith.constant 0 : index
      %c0_15 = arith.constant 0 : index
      %25 = vector.load %arg4[%c0_14, %c0_15] : memref<1x1xf32, #tpu.memory_space<vmem>>, vector<1x1xf32>
      %cst_16 = arith.constant 0.000000e+00 : f32
      %26 = vector.broadcast %cst_16 : f32 to vector<1x1xf32>
      %27 = arith.subf %26, %25 : vector<1x1xf32>
      %cst_17 = arith.constant 1.250000e-01 : f32
      %28 = vector.broadcast %cst_17 : f32 to vector<1x1xf32>
      %29 = arith.mulf %27, %28 : vector<1x1xf32>
      %c0_18 = arith.constant 0 : index
      %c0_19 = arith.constant 0 : index
      %30 = vector.load %arg3[%c0_18, %c0_19] : memref<1x1xf32, #tpu.memory_space<vmem>>, vector<1x1xf32>
      tpu.vector_store %arg3[%c0_18, %c0_19], %29 {strides = array<i32>} : memref<1x1xf32, #tpu.memory_space<vmem>>, vector<1x1xf32>,
    } else {
    }
    return
  }
  func.func @transform_0(%arg0: i32) -> (i32, i32) {
    %c0_i32 = arith.constant 0 : i32
    %c0_i32_0 = arith.constant 0 : i32
    return %arg0, %c0_i32 : i32, i32
  }
  func.func @transform_1(%arg0: i32) -> (i32, i32) {
    %c0_i32 = arith.constant 0 : i32
    %c0_i32_0 = arith.constant 0 : i32
    return %arg0, %c0_i32 : i32, i32
  }
  func.func @transform_2(%arg0: i32) -> (i32, i32) {
    %c0_i32 = arith.constant 0 : i32
    %c0_i32_0 = arith.constant 0 : i32
    %c0_i32_1 = arith.constant 0 : i32
    return %c0_i32, %c0_i32_0 : i32, i32
  }
}

</mosaic_0001>

<llo_original>
// kernel: tpu_custom_call.1
$region0: #{tpu_custom_call.1}
  #allocation0 [shape = 'u32[]', space=smem, size = 0x4, offset = 0x4, fixed_abs, tag = 'smem constant byte address 0x4 - core index']
  #allocation1 [shape = 'u32[144,128]{1,0:T(1,128)}', space=vmem, size = 0x12000, scoped, tag = 'internal scratch']
  #allocation2 [shape = 'f32[1,1]{1,0:T(1,128)}', space=vmem, size = 0x200, scoped, tag = 'scratch operand']
  %s0 = inlined_call_operand.hbm [shape: f32[8,128], index: 0, kind: input, shape index: {}]
  %s1 = inlined_call_operand.hbm [shape: f32[8,128], index: 1, kind: input, shape index: {}]
  %s2 = inlined_call_operand.hbm [shape: f32[1,1], index: 2, kind: output, shape index: {}]
  %s3 = sld [smem:[#allocation0]]
  $region34: #{tpu_custom_call.1} parent=0
    _
  %s5 = ssub.s32 1, %s3
  %s6 = scalar_select 0, %s5, %s3
  $region1: #{tpu_custom_call.1} parent=0
    #allocation3 [shape = 'u8[4096]{0}', space=vmem, size = 0x1000, scoped, tag = 'input window, operand 0, single buffered']
    #allocation4 [shape = 's32[1]{0}', space=sflag, size = 0x4, scoped, tag = 'scoped memory for tpu_custom_call.1']
    #allocation5 [shape = 's32[1]{0}', space=sflag, size = 0x4, scoped, tag = 'scoped memory for tpu_custom_call.1']
    #allocation6 [shape = 'u8[4096]{0}', space=vmem, size = 0x1000, scoped, tag = 'input window, operand 1, single buffered']
    #allocation7 [shape = 's32[1]{0}', space=sflag, size = 0x4, scoped, tag = 'scoped memory for tpu_custom_call.1']
    #allocation8 [shape = 'u8[512]{0}', space=vmem, size = 0x400, scoped, tag = 'output window, operand 0, single buffered']
    %7 = vsyncpa [#allocation4], 0
    %8 = vsyncpa [#allocation7], 0
    %9 = vsyncpa [#allocation5], 0
    // Predicated region
    $region2: #{tpu_custom_call.1} parent=1 // pred_check
      _
    $region3: #{tpu_custom_call.1} parent=1 // pred_check_branch
      %11 = sbr.rel (0) target = $region5
    $region4: #{tpu_custom_call.1} parent=1 // pred_region
      %s13 = ssub.s32 128, 128
      %14 = vsyncadd [#allocation4], %s13
      %s16 = sshll.u32 [#allocation3], 4
      %s17 = int_to_ptr.vmem [resolvable:$true] %s16
      %19 = dma.hbm_to_vmem [thread:$0]  %s0, 128, %s17, [#allocation4]
    $region5: #{tpu_custom_call.1} parent=1 // pred_fallthru
      _
    // Predicated region
    $region6: #{tpu_custom_call.1} parent=1 // pred_check
      _
    $region7: #{tpu_custom_call.1} parent=1 // pred_check_branch
      %21 = sbr.rel (0) target = $region9
    $region8: #{tpu_custom_call.1} parent=1 // pred_region
      %s23 = ssub.s32 128, 128
      %24 = vsyncadd [#allocation7], %s23
      %s26 = sshll.u32 [#allocation6], 4
      %s27 = int_to_ptr.vmem [resolvable:$true] %s26
      %29 = dma.hbm_to_vmem [thread:$0]  %s1, 128, %s27, [#allocation7]
    $region9: #{tpu_custom_call.1} parent=1 // pred_fallthru
      _
    // Predicated region
    $region10: #{tpu_custom_call.1} parent=1 // pred_check
      _
    $region11: #{tpu_custom_call.1} parent=1 // pred_check_branch
      %31 = sbr.rel (0) target = $region13
    $region12: #{tpu_custom_call.1} parent=1 // pred_region
      %32 = dma.done [#allocation4], 128
    $region13: #{tpu_custom_call.1} parent=1 // pred_fallthru
      _
    // Predicated region
    $region14: #{tpu_custom_call.1} parent=1 // pred_check
      _
    $region15: #{tpu_custom_call.1} parent=1 // pred_check_branch
      %34 = sbr.rel (0) target = $region17
    $region16: #{tpu_custom_call.1} parent=1 // pred_region
      %35 = dma.done [#allocation7], 128
    $region17: #{tpu_custom_call.1} parent=1 // pred_fallthru
      _
    %p36 = scmp.eq.s32.totalorder 0, 0
    // Predicated region
    $region18: #{tpu_custom_call.1} parent=1 // pred_check
      %p37 = pneg %p36
    $region19: #{tpu_custom_call.1} parent=1 // pred_check_branch
      %39 = sbr.rel (%p37) target = $region21
    $region20: #{tpu_custom_call.1} parent=1 // pred_region
      %vm40 = vcmask 0
      %41 = vst.msk [vmem:[#allocation2] sm:$0x1] %vm40, 0.0
    $region21: #{tpu_custom_call.1} parent=1 // pred_fallthru
      _
    %v42 = vld [vmem:[#allocation3] sm:$0xff]
    %v43 = vld [vmem:[#allocation6] sm:$0xff]
    %v44 = vmul.f32 %v42, %v43
    %vm45 = vcmp.ne.f32.partialorder %v44, 0.0
    %v46 = vsel %vm45, 1, 0
    %v47 = vcvt.s32.f32 %v46
    %48 = vadd.xlane.f32.xlu0 %v47
    %v49 = vpop.xlane.xlu0 %48
    %v50 = vadd.f32 %v49, 1e-09
    %51 = vadd.xlane.f32.xlu0 %v44
    %v52 = vpop.xlane.xlu0 %51
    %v53 = vld [vmem:[#allocation2] sm:$0x1]
    %v54 = vrcp.pop %v50
    %v55 = vmul.f32 %v52, %v54
    %v56 = vrot.slane %v55, 4
    %v57 = vadd.f32 %v55, %v56
    %v58 = vrot.slane %v57, 2
    %v59 = vadd.f32 %v57, %v58
    %v60 = vrot.slane %v59, 1
    %v61 = vadd.f32 %v59, %v60
    %v62 = vadd.f32 %v53, %v61
    %vm63 = vcmask 0
    %64 = vst.msk [vmem:[#allocation2] sm:$0x1] %vm63, %v62
    // Predicated region
    $region22: #{tpu_custom_call.1} parent=1 // pred_check
      %p65 = pneg %p36
    $region23: #{tpu_custom_call.1} parent=1 // pred_check_branch
      %67 = sbr.rel (%p65) target = $region25
    $region24: #{tpu_custom_call.1} parent=1 // pred_region
      %v68 = vld [vmem:[#allocation2] sm:$0x1]
      %v69 = vsub.f32 0.0, %v68
      %v70 = vmul.f32 %v69, 0.125
      %71 = vst.msk [vmem:[#allocation8] sm:$0x1] %vm63, %v70
    $region25: #{tpu_custom_call.1} parent=1 // pred_fallthru
      _
    // Predicated region
    $region26: #{tpu_custom_call.1} parent=1 // pred_check
      _
    $region27: #{tpu_custom_call.1} parent=1 // pred_check_branch
      %73 = sbr.rel (0) target = $region29
    $region28: #{tpu_custom_call.1} parent=1 // pred_region
      %s75 = ssub.s32 16, 16
      %76 = vsyncadd [#allocation5], %s75
      %s78 = sshll.u32 [#allocation8], 4
      %s79 = int_to_ptr.vmem [resolvable:$true] %s78
      %81 = dma.vmem_to_hbm [thread:$0]  %s79, 16, %s2, [#allocation5]
    $region29: #{tpu_custom_call.1} parent=1 // pred_fallthru
      _
    // Predicated region
    $region30: #{tpu_custom_call.1} parent=1 // pred_check
      _
    $region31: #{tpu_custom_call.1} parent=1 // pred_check_branch
      %83 = sbr.rel (0) target = $region33
    $region32: #{tpu_custom_call.1} parent=1 // pred_region
      %84 = dma.done [#allocation5], 16
    $region33: #{tpu_custom_call.1} parent=1 // pred_fallthru
      _
    %85 = vsyncpa [#allocation4], 1
    %86 = vsyncpa [#allocation7], 1
    %87 = vsyncpa [#allocation5], 1

</llo_original>
